<compile_context>
chip_gen: v7x
topology: tpu7x:2x2x1
jax: 0.10.0
libtpu: 0.0.40
codegen_flags: <defaults>
</compile_context>

<pallas_src>
import jax
import jax.numpy as jnp
from jax.experimental import pallas as pl
from jax.experimental.pallas import tpu as pltpu


_NEG_SENTINEL = -1e30   # masked / missing neighbours; scatter_('max') clamp zeroes them


def mrconv_kernel(xt_ref, xnt_ref, w1t_ref, w2t_ref, bt_ref, ot_ref):
    """One node tile, channel-major (lane axis = nodes, lane-dense).

    xt_ref  : [C,  TN]    destination features x_i, transposed
    xnt_ref : [K, C, TN]  gathered neighbour features x[nn_idx], transposed
    w1t_ref : [C_out, C]  W[:C].T  (x_i branch of the split 2C->C_out linear)
    w2t_ref : [C_out, C]  W[C:].T  (x_j branch)
    bt_ref  : [C_out, 1]
    ot_ref  : [C_out, TN]
    """
    x_t = xt_ref[...].astype(jnp.float32)                            # [C, TN]
    # Max-relative aggregation: K (=9) elementwise VPU maxes over lane-dense slabs.
    neigh_max = jnp.max(xnt_ref[...].astype(jnp.float32), axis=0)    # [C, TN]
    # max_j (x[src_j] - x[i]) == (max_j x[src_j]) - x[i]
    x_j = neigh_max - x_t
    # scatter_('max', ...) post-processing: entries < -10000 (including nodes
    # whose neighbours were all masked to the -1e30 sentinel) become 0.
    x_j = jnp.where(x_j < -10000.0, 0.0, x_j)
    # concat([x, x_j]) @ W  ==  W1.T @ x_t + W2.T @ x_j  (no lane-axis concat).
    y = (jnp.dot(w1t_ref[...], x_t, preferred_element_type=jnp.float32)
         + jnp.dot(w2t_ref[...], x_j, preferred_element_type=jnp.float32)
         + bt_ref[...])
    ot_ref[...] = jnp.maximum(y, 0.0).astype(ot_ref.dtype)           # ReLU


def _pick_tile_n(n, desired):
    """Lane-dense node-tile size: a multiple-of-128 divisor of n (or n itself),
    keeping >= 2 programs when possible so the single 'parallel' grid axis can
    shard across v7x's two TensorCores."""
    if n <= 128 or n % 128 != 0:
        return n                                  # single full-extent tile (legal)
    t = min(max((desired // 128) * 128, 128), n)
    while t > 128 and n % t != 0:
        t -= 128
    if n % t != 0:
        return n
    if n // t < 2 and t % 256 == 0:
        t //= 2                                   # keep both v7x TCs busy
    return t


def mrconv_forward(x, nn_idx, w, b, *, nbr_mask=None, tile_n=1024):
    """MRConv with per-destination neighbour lists.

    x: [N, C] features; nn_idx: [N, K] int neighbour ids; w: [2C, C_out]; b: [C_out].
    nbr_mask (optional bool [N, K]): False entries are ignored (treated like
    missing edges in scatter_('max')).
    """
    n, c = x.shape
    k = nn_idx.shape[1]
    c2, c_out = w.shape
    assert c2 == 2 * c, "weight must be [2*C, C_out]"

    # --- glue: O(N*K*C) neighbour gather + channel-major relayout -------------
    # TODO(synk): for very large N (where the gathered [N,K,C] HBM buffer or the
    # XLA gather matters) scalar-prefetch nn_idx and gather the K rows in-kernel.
    xn = x[nn_idx]                                               # [N, K, C]
    if nbr_mask is not None:
        xn = jnp.where(nbr_mask[:, :, None], xn,
                       jnp.asarray(_NEG_SENTINEL, x.dtype))
    xn_t = jnp.transpose(xn, (1, 2, 0))                          # [K, C, N] lane-dense on nodes
    x_t = x.T                                                    # [C, N]
    w1t = w[:c].T                                                # [C_out, C]
    w2t = w[c:].T                                                # [C_out, C]
    b_t = b.reshape(c_out, 1)

    tile = _pick_tile_n(n, tile_n)
    grid = (n // tile,)

    # --- generation-aware VMEM budget (v7x: 64 MiB/TC, v5e/v6e: 128 MiB) ------
    fsz = jnp.dtype(x.dtype).itemsize
    per_tile = tile * (k * c + c + c_out) * fsz                  # x_t + xn_t + out tiles
    est = 2 * per_tile + (2 * c * c_out + c_out) * 4             # double-buffered + weights
    try:
        cap = int(pltpu.get_tpu_info().vmem_capacity_bytes * 3 // 4)  # leave headroom
    except Exception:                                            # pragma: no cover
        cap = 48 * 1024 * 1024
    vmem_limit = int(min(max(4 * est, 16 * 1024 * 1024), cap))

    out_t = pl.pallas_call(
        mrconv_kernel,
        out_shape=jax.ShapeDtypeStruct((c_out, n), x.dtype),
        grid_spec=pltpu.PrefetchScalarGridSpec(
            num_scalar_prefetch=0,
            grid=grid,
            in_specs=[
                pl.BlockSpec((c, tile), lambda i: (0, i)),           # x_i^T
                pl.BlockSpec((k, c, tile), lambda i: (0, 0, i)),     # gathered neighbours^T
                pl.BlockSpec((c_out, c), lambda i: (0, 0)),          # W[:C]^T
                pl.BlockSpec((c_out, c), lambda i: (0, 0)),          # W[C:]^T
                pl.BlockSpec((c_out, 1), lambda i: (0, 0)),          # bias
            ],
            out_specs=pl.BlockSpec((c_out, tile), lambda i: (0, i)),
        ),
        compiler_params=pltpu.CompilerParams(
            dimension_semantics=("parallel",),
            vmem_limit_bytes=vmem_limit,
        ),
    )(x_t, xn_t, w1t, w2t, b_t)
    return out_t.T                                               # [N, C_out]


def dilated_knn_neighbors(x, k=9, dilation=1):
    """Per-destination neighbour ids equivalent to DilatedKnnGraph(knn='matrix').

    knn_graph_matrix keeps each node's k*dilation nearest neighbours (including
    the node itself, as torch.topk on -pairwise_distance does) stored
    contiguously per node; Dilated's edge_index[:, ::dilation] then selects
    every dilation-th of them, i.e. nn_idx[:, ::dilation]."""
    sq = jnp.sum(x * x, axis=-1, keepdims=True)
    dist = sq - 2.0 * (x @ x.T) + sq.T                  # pairwise squared distance
    _, nn_idx = jax.lax.top_k(-dist, k * dilation)      # [N, k*dilation]
    return nn_idx[:, ::dilation]                        # [N, k]


def dense_dyn_block_forward(x, w, b, *, k=9, dilation=1, nn_idx=None, tile_n=1024):
    """DenseDynBlock.forward: dynamic kNN graph -> MRConv -> concat([x, dense])."""
    if nn_idx is None:
        nn_idx = dilated_knn_neighbors(x, k=k, dilation=dilation)
    dense = mrconv_forward(x, nn_idx, w, b, tile_n=tile_n)
    return jnp.concatenate([x, dense], axis=1)          # dense-connection glue


def mrconv_reference(x, nn_idx, w, b, nbr_mask=None):
    """Plain-JAX reference mirroring the PyTorch MRConv (edge-list scatter max)."""
    n = x.shape[0]
    k = nn_idx.shape[1]
    src = nn_idx.reshape(-1)
    dst = jnp.repeat(jnp.arange(n, dtype=src.dtype), k)
    diff = x[src] - x[dst]
    if nbr_mask is not None:
        diff = jnp.where(nbr_mask.reshape(-1)[:, None], diff, _NEG_SENTINEL)
    x_j = jax.ops.segment_max(diff, dst, num_segments=n)
    x_j = jnp.where(x_j < -10000.0, 0.0, x_j)
    h = jnp.concatenate([x, x_j], axis=1)
    return jnp.maximum(h @ w + b, 0.0)


if __name__ == "__main__":
    key = jax.random.PRNGKey(0)
    k_x, k_w, k_b, k_nn, k_m = jax.random.split(key, 5)

    N, C, C_OUT, K = 256, 8, 16, 9
    x = jax.random.normal(k_x, (N, C), jnp.float32)
    # Deterministic Linear(2C -> C_OUT, bias=True) parameters (synthetic init).
    w = jax.random.normal(k_w, (2 * C, C_OUT), jnp.float32) * 0.1
    b = jax.random.normal(k_b, (C_OUT,), jnp.float32) * 0.1

    # 1) Full DenseDynBlock path: dynamic kNN graph + MRConv + dense concat.
    out = jax.block_until_ready(dense_dyn_block_forward(x, w, b, k=K, dilation=1))
    nn_idx = dilated_knn_neighbors(x, k=K, dilation=1)
    ref = jnp.concatenate([x, mrconv_reference(x, nn_idx, w, b)], axis=1)
    assert out.shape == (N, C + C_OUT)
    assert jnp.allclose(out, ref, atol=1e-4, rtol=1e-4), "DenseDynBlock mismatch"

    # 2) Dilation=2 path (Dilated's strided edge selection).
    out_d = jax.block_until_ready(dense_dyn_block_forward(x, w, b, k=K, dilation=2))
    nn_d = dilated_knn_neighbors(x, k=K, dilation=2)
    ref_d = jnp.concatenate([x, mrconv_reference(x, nn_d, w, b)], axis=1)
    assert jnp.allclose(out_d, ref_d, atol=1e-4, rtol=1e-4), "dilated DenseDynBlock mismatch"

    # 3) Random neighbour lists with fully-masked (isolated) destination nodes
    #    (exercises the scatter_('max') empty-neighbourhood clamp path).
    nn_r = jax.random.randint(k_nn, (N, K), 0, N, jnp.int32)
    mask = jax.random.bernoulli(k_m, 0.7, (N, K))
    mask = mask.at[-32:, :].set(False)                  # last 32 nodes isolated
    out_r = jax.block_until_ready(mrconv_forward(x, nn_r, w, b, nbr_mask=mask))
    ref_r = mrconv_reference(x, nn_r, w, b, nbr_mask=mask)
    assert jnp.allclose(out_r, ref_r, atol=1e-4, rtol=1e-4), "masked MRConv mismatch"

    print("KERNEL_OK")
</pallas_src>

<mosaic_0001>
module attributes {stable_mosaic.version = 11 : i64} {
  func.func @mrconv_kernel(%arg0: i32, %arg1: memref<8x128xf32, #tpu.memory_space<vmem>>, %arg2: memref<9x8x128xf32, #tpu.memory_space<vmem>>, %arg3: memref<16x8xf32, #tpu.memory_space<vmem>>, %arg4: memref<16x8xf32, #tpu.memory_space<vmem>>, %arg5: memref<16x1xf32, #tpu.memory_space<vmem>>, %arg6: memref<16x128xf32, #tpu.memory_space<vmem>>) attributes {dimension_semantics = [#tpu.dimension_semantics<parallel>], iteration_bounds = array<i64: 2>, scalar_prefetch = 0 : i64, scratch_operands = 0 : i64, tpu.core_type = #tpu.core_type<tc>, window_params = [{transform_indices = @transform_0, window_bounds = array<i64: 8, 128>}, {transform_indices = @transform_1, window_bounds = array<i64: 9, 8, 128>}, {pipeline_mode = #tpu.pipeline_mode<synchronous>, transform_indices = @transform_2, window_bounds = array<i64: 16, 8>}, {pipeline_mode = #tpu.pipeline_mode<synchronous>, transform_indices = @transform_3, window_bounds = array<i64: 16, 8>}, {pipeline_mode = #tpu.pipeline_mode<synchronous>, transform_indices = @transform_4, window_bounds = array<i64: 16, 1>}, {transform_indices = @transform_5, window_bounds = array<i64: 16, 128>}]} {
    %c0 = arith.constant 0 : index
    %c0_0 = arith.constant 0 : index
    %0 = vector.load %arg1[%c0, %c0_0] : memref<8x128xf32, #tpu.memory_space<vmem>>, vector<8x128xf32>
    %c0_1 = arith.constant 0 : index
    %c0_2 = arith.constant 0 : index
    %c0_3 = arith.constant 0 : index
    %1 = vector.load %arg2[%c0_1, %c0_2, %c0_3] : memref<9x8x128xf32, #tpu.memory_space<vmem>>, vector<9x8x128xf32>
    %cst = arith.constant dense<0xFF800000> : vector<8x128xf32>
    %2 = vector.multi_reduction <maximumf>, %1, %cst [0] : vector<9x8x128xf32> to vector<8x128xf32>
    %3 = arith.subf %2, %0 : vector<8x128xf32>
    %cst_4 = arith.constant -1.000000e+04 : f32
    %4 = vector.broadcast %cst_4 : f32 to vector<8x128xf32>
    %5 = arith.cmpf olt, %3, %4 : vector<8x128xf32>
    %cst_5 = arith.constant 0.000000e+00 : f32
    %6 = vector.broadcast %cst_5 : f32 to vector<8x128xf32>
    %7 = arith.select %5, %6, %3 : vector<8x128xi1>, vector<8x128xf32>
    %c0_6 = arith.constant 0 : index
    %c0_7 = arith.constant 0 : index
    %8 = vector.load %arg3[%c0_6, %c0_7] : memref<16x8xf32, #tpu.memory_space<vmem>>, vector<16x8xf32>
    %cst_8 = arith.constant dense<0.000000e+00> : vector<16x128xf32>
    %9 = tpu.matmul %8, %0, %cst_8 {dimension_numbers = #tpu.dot_dimension_numbers<[1], [0], [0], [1], [0, 0, 1, 1], [], []>} : vector<16x8xf32>, vector<8x128xf32>, vector<16x128xf32> -> vector<16x128xf32>
    %c0_9 = arith.constant 0 : index
    %c0_10 = arith.constant 0 : index
    %10 = vector.load %arg4[%c0_9, %c0_10] : memref<16x8xf32, #tpu.memory_space<vmem>>, vector<16x8xf32>
    %cst_11 = arith.constant dense<0.000000e+00> : vector<16x128xf32>
    %11 = tpu.matmul %10, %7, %cst_11 {dimension_numbers = #tpu.dot_dimension_numbers<[1], [0], [0], [1], [0, 0, 1, 1], [], []>} : vector<16x8xf32>, vector<8x128xf32>, vector<16x128xf32> -> vector<16x128xf32>
    %12 = arith.addf %9, %11 : vector<16x128xf32>
    %c0_12 = arith.constant 0 : index
    %c0_13 = arith.constant 0 : index
    %13 = vector.load %arg5[%c0_12, %c0_13] : memref<16x1xf32, #tpu.memory_space<vmem>>, vector<16x1xf32>
    %14 = vector.broadcast %13 : vector<16x1xf32> to vector<16x128xf32>
    %15 = arith.addf %12, %14 : vector<16x128xf32>
    %cst_14 = arith.constant 0.000000e+00 : f32
    %16 = vector.broadcast %cst_14 : f32 to vector<16x128xf32>
    %17 = arith.maximumf %15, %16 : vector<16x128xf32>
    %c0_15 = arith.constant 0 : index
    %c0_16 = arith.constant 0 : index
    %18 = vector.load %arg6[%c0_15, %c0_16] : memref<16x128xf32, #tpu.memory_space<vmem>>, vector<16x128xf32>
    tpu.vector_store %arg6[%c0_15, %c0_16], %17 {strides = array<i32>} : memref<16x128xf32, #tpu.memory_space<vmem>>, vector<16x128xf32>,
    return
  }
  func.func @transform_0(%arg0: i32) -> (i32, i32) {
    %c0_i32 = arith.constant 0 : i32
    %c0_i32_0 = arith.constant 0 : i32
    return %c0_i32, %arg0 : i32, i32
  }
  func.func @transform_1(%arg0: i32) -> (i32, i32, i32) {
    %c0_i32 = arith.constant 0 : i32
    %c0_i32_0 = arith.constant 0 : i32
    %c0_i32_1 = arith.constant 0 : i32
    return %c0_i32, %c0_i32_0, %arg0 : i32, i32, i32
  }
  func.func @transform_2(%arg0: i32) -> (i32, i32) {
    %c0_i32 = arith.constant 0 : i32
    %c0_i32_0 = arith.constant 0 : i32
    %c0_i32_1 = arith.constant 0 : i32
    return %c0_i32, %c0_i32_0 : i32, i32
  }
  func.func @transform_3(%arg0: i32) -> (i32, i32) {
    %c0_i32 = arith.constant 0 : i32
    %c0_i32_0 = arith.constant 0 : i32
    %c0_i32_1 = arith.constant 0 : i32
    return %c0_i32, %c0_i32_0 : i32, i32
  }
  func.func @transform_4(%arg0: i32) -> (i32, i32) {
    %c0_i32 = arith.constant 0 : i32
    %c0_i32_0 = arith.constant 0 : i32
    %c0_i32_1 = arith.constant 0 : i32
    return %c0_i32, %c0_i32_0 : i32, i32
  }
  func.func @transform_5(%arg0: i32) -> (i32, i32) {
    %c0_i32 = arith.constant 0 : i32
    %c0_i32_0 = arith.constant 0 : i32
    return %c0_i32, %arg0 : i32, i32
  }
}

</mosaic_0001>

<llo_original>
// kernel: tpu_custom_call.1
$region0: #{tpu_custom_call.1}
  #allocation0 [shape = 'u32[]', space=smem, size = 0x4, offset = 0x4, fixed_abs, tag = 'smem constant byte address 0x4 - core index']
  #allocation1 [shape = 'u32[144,128]{1,0:T(1,128)}', space=vmem, size = 0x12000, scoped, tag = 'internal scratch']
  %s0 = inlined_call_operand.vmem [shape: f32[8,256], index: 0, kind: input, shape index: {}]
  %s1 = inlined_call_operand.hbm [shape: f32[9,8,256], index: 1, kind: input, shape index: {}]
  %s2 = inlined_call_operand.vmem [shape: f32[16,8], index: 2, kind: input, shape index: {}]
  %s3 = inlined_call_operand.vmem [shape: f32[16,8], index: 3, kind: input, shape index: {}]
  %s4 = inlined_call_operand.vmem [shape: f32[16,1], index: 4, kind: input, shape index: {}]
  %s5 = inlined_call_operand.hbm [shape: f32[16,256], index: 5, kind: output, shape index: {}]
  %s6 = sld [smem:[#allocation0]]
  $region57: #{tpu_custom_call.1} parent=0
    _
  %s8 = ssub.s32 1, %s6
  %s9 = scalar_select 0, %s8, %s6
  $region1: #{tpu_custom_call.1} parent=0
    #allocation2 [shape = 'u8[73728]{0}', space=vmem, size = 0x12000, scoped, tag = 'input window, operand 1']
    #allocation3 [shape = 's32[2]{0}', space=sflag, size = 0x8, scoped, tag = 'scoped memory for tpu_custom_call.1']
    #allocation4 [shape = 's32[2]{0}', space=sflag, size = 0x8, scoped, tag = 'scoped memory for tpu_custom_call.1']
    #allocation5 [shape = 'u8[16384]{0}', space=vmem, size = 0x4000, scoped, tag = 'output window, operand 0']
    %10 = vsyncpa [#allocation3], 0
    %s11 = scalar_lea.sflag [#allocation3], 1
    %12 = vsyncpa %s11, 0
    %13 = vsyncpa [#allocation4], 0
    %s14 = scalar_lea.sflag [#allocation4], 1
    %15 = vsyncpa %s14, 0
    loop: start=0, step=1, limit=4
    $region2: #{tpu_custom_call.1} parent=1 // loop_pre_header
      _
    $region3: #{tpu_custom_call.1} parent=1 // loop_header
      %s17 = sphi 0, %s21
      %p18 = scmp.ge.s32.totalorder %s17, 4
      %s27 = sphi 0, %s29
      %s30 = sphi 0, %s27
      %s31 = sphi 0, %s30
      %s47 = sphi 0, %s31
      %s53 = sphi 0, %s55
      %s56 = sphi 0, %s53
      %s57 = sphi 0, %s56
      %s73 = sphi 0, %s57
      %s77 = sphi 0, %s77
      %s79 = sphi 0, %s77
      %s80 = sphi 0, %s79
      %s94 = sphi 0, %s80
      %s98 = sphi 0, %s98
      %s100 = sphi 0, %s98
      %s101 = sphi 0, %s100
      %s115 = sphi 0, %s101
      %s119 = sphi 0, %s119
      %s121 = sphi 0, %s119
      %s122 = sphi 0, %s121
      %s136 = sphi 0, %s122
      %s142 = sphi 0, %s144
      %s145 = sphi 0, %s142
      %s146 = sphi 0, %s145
      %s162 = sphi 0, %s146
    $region4: #{tpu_custom_call.1} parent=1 // loop_header_branch
      %20 = sbr.rel (%p18) target = $region8
    $region5: #{tpu_custom_call.1} parent=1 // loop_body
      %s22 = ssub.s32 %s17, 1
      %s23 = ssub.s32 %s17, 2
      %s24 = sadd.s32 %s17, 1
      %s25 = ssub.s32 %s17, %s24
      %p26 = scmp.eq.s32.totalorder %s25, 0
      %s28 = sadd.s32 %s27, 1
      %s29 = scalar_select %p26, %s27, %s28
      %p32 = pneg %p26
      %p33 = scmp.eq.s32.totalorder %s17, 1
      %p34 = por %p32, %p33
      %p35 = scmp.ne.s32.totalorder %s27, %s30
      %p36 = scmp.eq.s32.totalorder %s17, 0
      %p37 = por %p35, %p36
      %p38 = scmp.ne.s32.totalorder %s27, %s30
      %p39 = scmp.eq.s32.totalorder %s22, 1
      %p40 = por %p38, %p39
      %p41 = scmp.ne.s32.totalorder %s30, %s31
      %p42 = scmp.eq.s32.totalorder %s22, 0
      %p43 = por %p41, %p42
      %p44 = scmp.ne.s32.totalorder %s30, %s31
      %p45 = scmp.eq.s32.totalorder %s23, 1
      %p46 = por %p44, %p45
      %p48 = scmp.ne.s32.totalorder %s31, %s47
      %p49 = scmp.eq.s32.totalorder %s23, 0
      %p50 = por %p48, %p49
      %s51 = ssub.s32 %s17, %s24
      %p52 = scmp.eq.s32.totalorder %s51, 0
      %s54 = sadd.s32 %s53, 1
      %s55 = scalar_select %p52, %s53, %s54
      %p58 = pneg %p52
      %p59 = scmp.eq.s32.totalorder %s17, 1
      %p60 = por %p58, %p59
      %p61 = scmp.ne.s32.totalorder %s53, %s56
      %p62 = scmp.eq.s32.totalorder %s17, 0
      %p63 = por %p61, %p62
      %p64 = scmp.ne.s32.totalorder %s53, %s56
      %p65 = scmp.eq.s32.totalorder %s22, 1
      %p66 = por %p64, %p65
      %p67 = scmp.ne.s32.totalorder %s56, %s57
      %p68 = scmp.eq.s32.totalorder %s22, 0
      %p69 = por %p67, %p68
      %p70 = scmp.ne.s32.totalorder %s56, %s57
      %p71 = scmp.eq.s32.totalorder %s23, 1
      %p72 = por %p70, %p71
      %p74 = scmp.ne.s32.totalorder %s57, %s73
      %p75 = scmp.eq.s32.totalorder %s23, 0
      %p76 = por %p74, %p75
      %s78 = sadd.s32 %s77, 1
      %p81 = scmp.eq.s32.totalorder %s17, 1
      %p82 = scmp.ne.s32.totalorder %s77, %s79
      %p83 = scmp.eq.s32.totalorder %s17, 0
      %p84 = por %p82, %p83
      %p85 = scmp.ne.s32.totalorder %s77, %s79
      %p86 = scmp.eq.s32.totalorder %s22, 1
      %p87 = por %p85, %p86
      %p88 = scmp.ne.s32.totalorder %s79, %s80
      %p89 = scmp.eq.s32.totalorder %s22, 0
      %p90 = por %p88, %p89
      %p91 = scmp.ne.s32.totalorder %s79, %s80
      %p92 = scmp.eq.s32.totalorder %s23, 1
      %p93 = por %p91, %p92
      %p95 = scmp.ne.s32.totalorder %s80, %s94
      %p96 = scmp.eq.s32.totalorder %s23, 0
      %p97 = por %p95, %p96
      %s99 = sadd.s32 %s98, 1
      %p102 = scmp.eq.s32.totalorder %s17, 1
      %p103 = scmp.ne.s32.totalorder %s98, %s100
      %p104 = scmp.eq.s32.totalorder %s17, 0
      %p105 = por %p103, %p104
      %p106 = scmp.ne.s32.totalorder %s98, %s100
      %p107 = scmp.eq.s32.totalorder %s22, 1
      %p108 = por %p106, %p107
      %p109 = scmp.ne.s32.totalorder %s100, %s101
      %p110 = scmp.eq.s32.totalorder %s22, 0
      %p111 = por %p109, %p110
      %p112 = scmp.ne.s32.totalorder %s100, %s101
      %p113 = scmp.eq.s32.totalorder %s23, 1
      %p114 = por %p112, %p113
      %p116 = scmp.ne.s32.totalorder %s101, %s115
      %p117 = scmp.eq.s32.totalorder %s23, 0
      %p118 = por %p116, %p117
      %s120 = sadd.s32 %s119, 1
      %p123 = scmp.eq.s32.totalorder %s17, 1
      %p124 = scmp.ne.s32.totalorder %s119, %s121
      %p125 = scmp.eq.s32.totalorder %s17, 0
      %p126 = por %p124, %p125
      %p127 = scmp.ne.s32.totalorder %s119, %s121
      %p128 = scmp.eq.s32.totalorder %s22, 1
      %p129 = por %p127, %p128
      %p130 = scmp.ne.s32.totalorder %s121, %s122
      %p131 = scmp.eq.s32.totalorder %s22, 0
      %p132 = por %p130, %p131
      %p133 = scmp.ne.s32.totalorder %s121, %s122
      %p134 = scmp.eq.s32.totalorder %s23, 1
      %p135 = por %p133, %p134
      %p137 = scmp.ne.s32.totalorder %s122, %s136
      %p138 = scmp.eq.s32.totalorder %s23, 0
      %p139 = por %p137, %p138
      %s140 = ssub.s32 %s17, %s24
      %p141 = scmp.eq.s32.totalorder %s140, 0
      %s143 = sadd.s32 %s142, 1
      %s144 = scalar_select %p141, %s142, %s143
      %p147 = pneg %p141
      %p148 = scmp.eq.s32.totalorder %s17, 1
      %p149 = por %p147, %p148
      %p150 = scmp.ne.s32.totalorder %s142, %s145
      %p151 = scmp.eq.s32.totalorder %s17, 0
      %p152 = por %p150, %p151
      %p153 = scmp.ne.s32.totalorder %s142, %s145
      %p154 = scmp.eq.s32.totalorder %s22, 1
      %p155 = por %p153, %p154
      %p156 = scmp.ne.s32.totalorder %s145, %s146
      %p157 = scmp.eq.s32.totalorder %s22, 0
      %p158 = por %p156, %p157
      %p159 = scmp.ne.s32.totalorder %s145, %s146
      %p160 = scmp.eq.s32.totalorder %s23, 1
      %p161 = por %p159, %p160
      %p163 = scmp.ne.s32.totalorder %s146, %s162
      %p164 = scmp.eq.s32.totalorder %s23, 0
      %p165 = por %p163, %p164
      %p166 = scmp.le.s32.totalorder 1, %s17
      %p167 = scmp.lt.s32.totalorder %s17, 3
      %p168 = pnand %p166, %p167
      %p169 = pneg %p168
      // Predicated region
      $region9: #{tpu_custom_call.1} parent=5 // pred_check
        _
      $region10: #{tpu_custom_call.1} parent=5 // pred_check_branch
        %171 = sbr.rel (%p168) target = $region12
      $region11: #{tpu_custom_call.1} parent=5 // pred_region
        %s172 = ssub.s32 %s17, 1
        // Predicated region
        $region13: #{tpu_custom_call.1} parent=11 // pred_check
          %p173 = pneg %p90
        $region14: #{tpu_custom_call.1} parent=11 // pred_check_branch
          %175 = sbr.rel (%p173) target = $region16
        $region15: #{tpu_custom_call.1} parent=11 // pred_region
          _
        $region16: #{tpu_custom_call.1} parent=11 // pred_fallthru
          _
        // Predicated region
        $region17: #{tpu_custom_call.1} parent=11 // pred_check
          %p176 = pneg %p111
        $region18: #{tpu_custom_call.1} parent=11 // pred_check_branch
          %178 = sbr.rel (%p176) target = $region20
        $region19: #{tpu_custom_call.1} parent=11 // pred_region
          _
        $region20: #{tpu_custom_call.1} parent=11 // pred_fallthru
          _
        // Predicated region
        $region21: #{tpu_custom_call.1} parent=11 // pred_check
          %p179 = pneg %p132
        $region22: #{tpu_custom_call.1} parent=11 // pred_check_branch
          %181 = sbr.rel (%p179) target = $region24
        $region23: #{tpu_custom_call.1} parent=11 // pred_region
          _
        $region24: #{tpu_custom_call.1} parent=11 // pred_fallthru
          _
      $region12: #{tpu_custom_call.1} parent=5 // pred_fallthru
        _
      %p182 = scmp.lt.s32.totalorder %s17, 2
      // Predicated region
      $region25: #{tpu_custom_call.1} parent=5 // pred_check
        %p183 = pneg %p182
      $region26: #{tpu_custom_call.1} parent=5 // pred_check_branch
        %185 = sbr.rel (%p183) target = $region28
      $region27: #{tpu_custom_call.1} parent=5 // pred_region
        // Predicated region
        $region29: #{tpu_custom_call.1} parent=27 // pred_check
          %p186 = pneg %p37
        $region30: #{tpu_custom_call.1} parent=27 // pred_check_branch
          %188 = sbr.rel (%p186) target = $region32
        $region31: #{tpu_custom_call.1} parent=27 // pred_region
          %p189 = scmp.lt.s32.totalorder %s17, 1
          %s190 = scalar_select %p189, %s17, 1
          %s191 = smul.addr %s190, 8
          %s192 = scalar_lea.vmem %s0, %s191
        $region32: #{tpu_custom_call.1} parent=27 // pred_fallthru
          _
        // Predicated region
        $region33: #{tpu_custom_call.1} parent=27 // pred_check
          %p193 = pneg %p63
        $region34: #{tpu_custom_call.1} parent=27 // pred_check_branch
          %195 = sbr.rel (%p193) target = $region36
        $region35: #{tpu_custom_call.1} parent=27 // pred_region
          %s196 = sand.u32 %s53, 1
          %s197 = scalar_lea.sflag [#allocation3], %s196
          %s198 = sand.u32 %s53, 1
          %s199 = smul.addr %s198, 72
          %s200 = scalar_lea.vmem [#allocation2], %s199
          %s202 = ssub.s32 1152, 1152
          %203 = vsyncadd %s197, %s202
          %s204 = smul.addr %s17, 128
          %s205 = scalar_lea.hbm %s1, %s204
          %s206 = sshll.u32 %s200, 4
          %s207 = int_to_ptr.vmem [resolvable:$true] %s206
          %212 = dma.hbm_to_vmem [thread:$0]  %s205, 1152, %s207, %s197, 256, 128, 8
        $region36: #{tpu_custom_call.1} parent=27 // pred_fallthru
          _
      $region28: #{tpu_custom_call.1} parent=5 // pred_fallthru
        _
      %p213 = scmp.le.s32.totalorder 1, %s17
      %p214 = scmp.lt.s32.totalorder %s17, 3
      %p215 = pnand %p213, %p214
      %p216 = pneg %p215
      // Predicated region
      $region37: #{tpu_custom_call.1} parent=5 // pred_check
        _
      $region38: #{tpu_custom_call.1} parent=5 // pred_check_branch
        %218 = sbr.rel (%p215) target = $region40
      $region39: #{tpu_custom_call.1} parent=5 // pred_region
        %s219 = ssub.s32 %s17, 1
        %s220 = sand.u32 %s56, 1
        %s221 = scalar_lea.sflag [#allocation3], %s220
        %s222 = sand.u32 %s56, 1
        %s223 = smul.addr %s222, 72
        %s224 = scalar_lea.vmem [#allocation2], %s223
        // Predicated region
        $region41: #{tpu_custom_call.1} parent=39 // pred_check
          %p225 = pneg %p69
        $region42: #{tpu_custom_call.1} parent=39 // pred_check_branch
          %227 = sbr.rel (%p225) target = $region44
        $region43: #{tpu_custom_call.1} parent=39 // pred_region
          %228 = dma.done %s221, 1152
        $region44: #{tpu_custom_call.1} parent=39 // pred_fallthru
          _
        %p229 = scmp.lt.s32.totalorder %s22, 1
        %s230 = scalar_select %p229, %s22, 1
        %s231 = smul.addr %s230, 8
        %s232 = scalar_lea.vmem %s0, %s231
        %p233 = pneg %p43
        %p234 = pneg %p40
        %s235 = sand.u32 %s56, 1
        %s236 = scalar_lea.sflag [#allocation3], %s235
        %s237 = sand.u32 %s56, 1
        %s238 = smul.addr %s237, 72
        %s239 = scalar_lea.vmem [#allocation2], %s238
        %p240 = pneg %p69
        %p241 = pneg %p66
        %p242 = pneg %p90
        %p243 = pneg %p87
        %p244 = pneg %p111
        %p245 = pneg %p108
        %p246 = pneg %p132
        %p247 = pneg %p129
        %p248 = pneg %p158
        %p249 = pneg %p155
        %s250 = sand.u32 %s145, 1
        %s251 = scalar_lea.sflag [#allocation4], %s250
        %s252 = sand.u32 %s145, 1
        %s253 = smul.addr %s252, 16
        %s254 = scalar_lea.vmem [#allocation5], %s253
        %p255 = scmp.lt.s32.totalorder %s22, 1
        %s256 = scalar_select %p255, %s22, 1
        %s257 = smul.addr %s256, 8
        %s258 = scalar_lea.vmem %s0, %s257
        %v259 = vld [vmem:[%s258] sm:$0xff]
        %v260 = vld [vmem:[%s224] sm:$0xff]
        %v261 = vld [vmem:[%s224 + $0x8] sm:$0xff]
        %v262 = vld [vmem:[%s224 + $0x10] sm:$0xff]
        %v263 = vld [vmem:[%s224 + $0x18] sm:$0xff]
        %v264 = vld [vmem:[%s224 + $0x20] sm:$0xff]
        %v265 = vld [vmem:[%s224 + $0x28] sm:$0xff]
        %v266 = vld [vmem:[%s224 + $0x30] sm:$0xff]
        %v267 = vld [vmem:[%s224 + $0x38] sm:$0xff]
        %v268 = vld [vmem:[%s224 + $0x40] sm:$0xff]
        %v269 = vmax.f32 %v260, %v264
        %v270 = vmax.f32 %v261, %v265
        %v271 = vmax.f32 %v262, %v266
        %v272 = vmax.f32 %v263, %v267
        %v273 = vmax.f32 %v269, %v268
        %v274 = vmax.f32 %v273, %v270
        %v275 = vmax.f32 %v271, %v272
        %v276 = vmax.f32 %v274, %v275
        %v277 = vsub.f32 %v276, %v259
        %vm278 = vcmp.lt.f32.partialorder %v277, -10000.0
        %v279 = vsel %vm278, 0.0, %v277
        %v280 = vld [vmem:[%s2] sm:$0xff]
        %v281 = vld [vmem:[%s2 + $0x8] sm:$0xff]
        %v282 = vld [vmem:[%s3] sm:$0xff]
        %v283 = vld [vmem:[%s3 + $0x8] sm:$0xff]
        %vm284 = vcmask 64512
        %v286 = vsel %vm284, %v282, 0
        %v289 = vsel %vm284, %v283, 0
        %291 = vmatprep.subr.mxu0 0.0
        %292 = vmatpush1.msra.mxu0 %v279
        %293 = vmatprep.subr.mxu0 0.0
        %294 = vmatpush1.msra.mxu0 0.0
        %295 = vmatprep.subr.mxu0 0.0
        %296 = vmatpush1.msra.mxu0 0.0
        %297 = vmatprep.subr.mxu0 0.0
        %298 = vmatpush1.msra.mxu0 0.0
        %299 = vmatprep.subr.mxu0 0.0
        %300 = vmatpush1.msra.mxu0 0.0
        %301 = vmatprep.subr.mxu0 0.0
        %302 = vmatpush1.msra.mxu0 0.0
        %303 = vmatprep.subr.mxu0 0.0
        %304 = vmatpush1.msra.mxu0 0.0
        %305 = vmatprep.subr.mxu0 0.0
        %306 = vmatpush1.msra.mxu0 0.0
        %307 = vmatprep.subr.mxu0 0.0
        %308 = vmatpush1.msra.mxu0 0.0
        %309 = vmatprep.subr.mxu0 0.0
        %310 = vmatpush1.msra.mxu0 0.0
        %311 = vmatprep.subr.mxu0 0.0
        %312 = vmatpush1.msra.mxu0 0.0
        %313 = vmatprep.subr.mxu0 0.0
        %314 = vmatpush1.msra.mxu0 0.0
        %315 = vmatprep.subr.mxu0 0.0
        %316 = vmatpush1.msra.mxu0 0.0
        %317 = vmatprep.subr.mxu0 0.0
        %318 = vmatpush1.msra.mxu0 0.0
        %319 = vmatprep.subr.mxu0 0.0
        %320 = vmatpush1.msra.mxu0 0.0
        %321 = vmatprep.subr.mxu0 0.0
        %322 = vmatpush1.msra.mxu0 0.0
        %323 = vmatprep.subr.mxu0 0.0
        %324 = vmatpush1.msra.mxu0 0.0
        %325 = vmatprep.subr.mxu0 0.0
        %326 = vmatpush1.msra.mxu0 0.0
        %327 = vmatprep.subr.mxu0 0.0
        %328 = vmatpush1.msra.mxu0 0.0
        %329 = vmatprep.subr.mxu0 0.0
        %330 = vmatpush1.msra.mxu0 0.0
        %331 = vmatprep.subr.mxu0 0.0
        %332 = vmatpush1.msra.mxu0 0.0
        %333 = vmatprep.subr.mxu0 0.0
        %334 = vmatpush1.msra.mxu0 0.0
        %335 = vmatprep.subr.mxu0 0.0
        %336 = vmatpush1.msra.mxu0 0.0
        %337 = vmatprep.subr.mxu0 0.0
        %338 = vmatpush1.msra.mxu0 0.0
        %339 = vmatprep.subr.mxu0 0.0
        %340 = vmatpush1.msra.mxu0 0.0
        %341 = vmatprep.subr.mxu0 0.0
        %342 = vmatpush1.msra.mxu0 0.0
        %343 = vmatprep.subr.mxu0 0.0
        %344 = vmatpush1.msra.mxu0 0.0
        %345 = vmatprep.subr.mxu0 0.0
        %346 = vmatpush1.msra.mxu0 0.0
        %347 = vmatprep.subr.mxu0 0.0
        %348 = vmatpush1.msra.mxu0 0.0
        %349 = vmatprep.subr.mxu0 0.0
        %350 = vmatpush1.msra.mxu0 0.0
        %351 = vmatprep.subr.mxu0 0.0
        %352 = vmatpush1.msra.mxu0 0.0
        %353 = vmatprep.subr.mxu0 0.0
        %354 = vmatpush1.msra.mxu0 0.0
        %355 = vmatprep.mubr.f32.mxu0 0.0
        %356 = vmatmul.mubr.f32.gmra.mrb[0].mxu0 %v286
        %v357 = vpop.f32.mrb[0].mxu0
        %v358 = vadd.f32 0.0, %v357
        %v359 = vpop.f32.mrb[0].mxu0
        %360 = vmatprep.mubr.f32.mxu0 0.0
        %361 = vmatmul.mubr.f32.gmra.mrb[0].mxu0 %v289
        %v362 = vpop.f32.mrb[0].mxu0
        %v363 = vadd.f32 0.0, %v362
        %v364 = vpop.f32.mrb[0].mxu0
        %365 = vdwg.mxu0
        %v367 = vsel %vm284, %v280, 0
        %v370 = vsel %vm284, %v281, 0
        %372 = vmatprep.subr.mxu0 0.0
        %373 = vmatpush1.msra.mxu0 %v259
        %374 = vmatprep.subr.mxu0 0.0
        %375 = vmatpush1.msra.mxu0 0.0
        %376 = vmatprep.subr.mxu0 0.0
        %377 = vmatpush1.msra.mxu0 0.0
        %378 = vmatprep.subr.mxu0 0.0
        %379 = vmatpush1.msra.mxu0 0.0
        %380 = vmatprep.subr.mxu0 0.0
        %381 = vmatpush1.msra.mxu0 0.0
        %382 = vmatprep.subr.mxu0 0.0
        %383 = vmatpush1.msra.mxu0 0.0
        %384 = vmatprep.subr.mxu0 0.0
        %385 = vmatpush1.msra.mxu0 0.0
        %386 = vmatprep.subr.mxu0 0.0
        %387 = vmatpush1.msra.mxu0 0.0
        %388 = vmatprep.subr.mxu0 0.0
        %389 = vmatpush1.msra.mxu0 0.0
        %390 = vmatprep.subr.mxu0 0.0
        %391 = vmatpush1.msra.mxu0 0.0
        %392 = vmatprep.subr.mxu0 0.0
        %393 = vmatpush1.msra.mxu0 0.0
        %394 = vmatprep.subr.mxu0 0.0
        %395 = vmatpush1.msra.mxu0 0.0
        %396 = vmatprep.subr.mxu0 0.0
        %397 = vmatpush1.msra.mxu0 0.0
        %398 = vmatprep.subr.mxu0 0.0
        %399 = vmatpush1.msra.mxu0 0.0
        %400 = vmatprep.subr.mxu0 0.0
        %401 = vmatpush1.msra.mxu0 0.0
        %402 = vmatprep.subr.mxu0 0.0
        %403 = vmatpush1.msra.mxu0 0.0
        %404 = vmatprep.subr.mxu0 0.0
        %405 = vmatpush1.msra.mxu0 0.0
        %406 = vmatprep.subr.mxu0 0.0
        %407 = vmatpush1.msra.mxu0 0.0
        %408 = vmatprep.subr.mxu0 0.0
        %409 = vmatpush1.msra.mxu0 0.0
        %410 = vmatprep.subr.mxu0 0.0
        %411 = vmatpush1.msra.mxu0 0.0
        %412 = vmatprep.subr.mxu0 0.0
        %413 = vmatpush1.msra.mxu0 0.0
        %414 = vmatprep.subr.mxu0 0.0
        %415 = vmatpush1.msra.mxu0 0.0
        %416 = vmatprep.subr.mxu0 0.0
        %417 = vmatpush1.msra.mxu0 0.0
        %418 = vmatprep.subr.mxu0 0.0
        %419 = vmatpush1.msra.mxu0 0.0
        %420 = vmatprep.subr.mxu0 0.0
        %421 = vmatpush1.msra.mxu0 0.0
        %422 = vmatprep.subr.mxu0 0.0
        %423 = vmatpush1.msra.mxu0 0.0
        %424 = vmatprep.subr.mxu0 0.0
        %425 = vmatpush1.msra.mxu0 0.0
        %426 = vmatprep.subr.mxu0 0.0
        %427 = vmatpush1.msra.mxu0 0.0
        %428 = vmatprep.subr.mxu0 0.0
        %429 = vmatpush1.msra.mxu0 0.0
        %430 = vmatprep.subr.mxu0 0.0
        %431 = vmatpush1.msra.mxu0 0.0
        %432 = vmatprep.subr.mxu0 0.0
        %433 = vmatpush1.msra.mxu0 0.0
        %434 = vmatprep.subr.mxu0 0.0
        %435 = vmatpush1.msra.mxu0 0.0
        %436 = vmatprep.mubr.f32.mxu0 0.0
        %437 = vmatmul.mubr.f32.gmra.mrb[0].mxu0 %v367
        %v438 = vpop.f32.mrb[0].mxu0
        %v439 = vadd.f32 %v358, %v438
        %v440 = vpop.f32.mrb[0].mxu0
        %441 = vmatprep.mubr.f32.mxu0 0.0
        %442 = vmatmul.mubr.f32.gmra.mrb[0].mxu0 %v370
        %v443 = vpop.f32.mrb[0].mxu0
        %v444 = vadd.f32 %v363, %v443
        %v445 = vpop.f32.mrb[0].mxu0
        %446 = vdwg.mxu0
        %v447 = vld [vmem:[%s4] sm:$0xff]
        %v448 = vld [vmem:[%s4 + $0x8] sm:$0xff]
        %450 = vset.pattern.permute.xlu0 0
        %451 = vperm.xlu0 %450, %v447
        %v452 = vpop.permute.xlu0 %451
        %455 = vset.pattern.permute.xlu0 0
        %456 = vperm.xlu0 %455, %v448
        %v457 = vpop.permute.xlu0 %456
        %v459 = vadd.f32 %v439, %v452
        %v460 = vadd.f32 %v444, %v457
        %v461 = vmax.f32 %v459, 0.0
        %v462 = vmax.f32 %v460, 0.0
        %463 = vst [vmem:[%s254] sm:$0xff] %v461
        %464 = vst [vmem:[%s254 + $0x8] sm:$0xff] %v462
        %s465 = sand.u32 %s145, 1
        %s466 = scalar_lea.sflag [#allocation4], %s465
        %s467 = sand.u32 %s145, 1
        %s468 = smul.addr %s467, 16
        %s469 = scalar_lea.vmem [#allocation5], %s468
        // Predicated region
        $region45: #{tpu_custom_call.1} parent=39 // pred_check
          %p470 = pneg %p155
        $region46: #{tpu_custom_call.1} parent=39 // pred_check_branch
          %472 = sbr.rel (%p470) target = $region48
        $region47: #{tpu_custom_call.1} parent=39 // pred_region
          %s474 = ssub.s32 256, 256
          %475 = vsyncadd %s466, %s474
          %s476 = smul.addr %s22, 128
          %s477 = scalar_lea.hbm %s5, %s476
          %s478 = sshll.u32 %s469, 4
          %s479 = int_to_ptr.vmem [resolvable:$true] %s478
          %484 = dma.vmem_to_hbm [thread:$0]  %s479, 256, %s477, %s466, 128, 256, 8
        $region48: #{tpu_custom_call.1} parent=39 // pred_fallthru
          _
      $region40: #{tpu_custom_call.1} parent=5 // pred_fallthru
        _
      %p485 = scmp.le.s32.totalorder 2, %s17
      // Predicated region
      $region49: #{tpu_custom_call.1} parent=5 // pred_check
        %p486 = pneg %p485
      $region50: #{tpu_custom_call.1} parent=5 // pred_check_branch
        %488 = sbr.rel (%p486) target = $region52
      $region51: #{tpu_custom_call.1} parent=5 // pred_region
        %s489 = ssub.s32 %s17, 2
        // Predicated region
        $region53: #{tpu_custom_call.1} parent=51 // pred_check
          %p490 = pneg %p161
        $region54: #{tpu_custom_call.1} parent=51 // pred_check_branch
          %492 = sbr.rel (%p490) target = $region56
        $region55: #{tpu_custom_call.1} parent=51 // pred_region
          %s493 = sand.u32 %s146, 1
          %s494 = scalar_lea.sflag [#allocation4], %s493
          %s495 = sand.u32 %s146, 1
          %s496 = smul.addr %s495, 16
          %s497 = scalar_lea.vmem [#allocation5], %s496
          %498 = dma.done %s494, 256
        $region56: #{tpu_custom_call.1} parent=51 // pred_fallthru
          _
      $region52: #{tpu_custom_call.1} parent=5 // pred_fallthru
        _
    $region6: #{tpu_custom_call.1} parent=1 // loop_footer
      %s21 = sadd.s32 1, %s17
    $region7: #{tpu_custom_call.1} parent=1 // loop_footer_branch
      %16 = sbr.rel target = $region3
    $region8: #{tpu_custom_call.1} parent=1 // loop_exit
      _
    %499 = vsyncpa [#allocation3], 1
    %s500 = scalar_lea.sflag [#allocation3], 1
    %501 = vsyncpa %s500, 1
    %502 = vsyncpa [#allocation4], 1
    %s503 = scalar_lea.sflag [#allocation4], 1
    %504 = vsyncpa %s503, 1

</llo_original>
